<compile_context>
chip_gen: v7x
topology: tpu7x:2x2x1
jax: 0.10.0
libtpu: 0.0.40
codegen_flags: <defaults>
</compile_context>

<pallas_src>
import math
import functools

import jax
import jax.numpy as jnp
from jax.experimental import pallas as pl
from jax.experimental.pallas import tpu as pltpu


def _round_up(x, m):
    return (x + m - 1) // m * m


def _cdiv(a, b):
    return (a + b - 1) // b


def _sigmoid_via_tanh(z):
    # sigmoid(z) = 0.5*(tanh(z/2)+1): one EUP transcendental, exact in f32.
    return 0.5 * jnp.tanh(0.5 * z) + 0.5


def _pick_tile_h(h_pad, tile_h):
    """Largest multiple of 128 <= min(tile_h, h_pad) that divides h_pad."""
    th = min(_round_up(tile_h, 128), h_pad)
    while h_pad % th:
        th -= 128
    return th


def _pack_gates(a, H, H_pad, TH):
    """Re-pack the trailing 4H axis (torch gate order [i,f,g,o]) per H-tile.

    (..., 4*H) -> (..., G*4*TH) where G = H_pad // TH and each contiguous
    4*TH slab holds [i, f, g, o] for one lane-aligned tile of the hidden dim.
    """
    lead = a.shape[:-1]
    G = H_pad // TH
    a = a.reshape(lead + (4, H))
    a = jnp.pad(a, [(0, 0)] * len(lead) + [(0, 0), (0, H_pad - H)])
    a = a.reshape(lead + (4, G, TH))
    a = jnp.moveaxis(a, -3, -2)          # (..., G, 4, TH)
    return a.reshape(lead + (G * 4 * TH,))


def prepare_lstm_params(wx_t, wh_t, bx, bh, *, tile_h=256, mxu_dtype=jnp.bfloat16):
    """One-time parameter prep (pack gate tiles + cast to MXU dtype).

    Call once and cache the result; the per-step lstm_cell() below only touches
    activations. wx_t: (I, 4H), wh_t: (H, 4H) (nn.Linear weights transposed),
    bx/bh: (1, 4H).
    """
    I, fourH = wx_t.shape
    H = fourH // 4
    H_pad = _round_up(H, 128)
    TH = _pick_tile_h(H_pad, tile_h)

    wx_p = _pack_gates(wx_t, H, H_pad, TH).astype(mxu_dtype)          # (I, G*4*TH)
    wh_p = _pack_gates(wh_t, H, H_pad, TH).astype(mxu_dtype)          # (H, G*4*TH)
    b_p = _pack_gates((bx + bh).reshape(1, 4 * H), H, H_pad, TH)      # (1, G*4*TH) f32
    b_p = b_p.astype(jnp.float32)
    # TODO(synk): on v7x, optionally store weights as fp8 with per-gate-tile
    # scales applied to the f32 accumulator to halve the weight HBM stream.
    return {"wx": wx_p, "wh": wh_p, "b": b_p,
            "I": I, "H": H, "H_pad": H_pad, "TH": TH, "mxu_dtype": mxu_dtype}


def lstm_cell_kernel(x_ref, hx_ref, wx_ref, wh_ref, b_ref, cx_ref,
                     hy_ref, cy_ref, *, TH):
    # Two MXU matmuls into one f32 accumulator (bf16 operands).
    gates = (
        jnp.dot(x_ref[...], wx_ref[...], preferred_element_type=jnp.float32)
        + jnp.dot(hx_ref[...], wh_ref[...], preferred_element_type=jnp.float32)
        + b_ref[...]
    )

    # Packed gate order inside this 4*TH tile: [i, f, g, o], each TH lanes
    # wide (TH % 128 == 0 -> every slice/store below is lane-dense).
    ingate     = _sigmoid_via_tanh(gates[:, 0 * TH:1 * TH])
    forgetgate = _sigmoid_via_tanh(gates[:, 1 * TH:2 * TH])
    cellgate   = jnp.tanh(gates[:, 2 * TH:3 * TH])
    outgate    = _sigmoid_via_tanh(gates[:, 3 * TH:4 * TH])

    cy = cx_ref[...] * forgetgate + ingate * cellgate
    hy = outgate * jnp.tanh(cy)

    cy_ref[...] = cy                               # f32 cell state (no bf16 drift)
    hy_ref[...] = hy.astype(hy_ref.dtype)


def _vmem_limit_bytes(TB, TH, I, H, act_bytes, hy_bytes):
    dbl = 2  # Pallas double-buffers each pipelined input/output block
    fp = dbl * (TB * I * act_bytes          # x tile
                + TB * H * act_bytes        # hx tile
                + I * 4 * TH * act_bytes    # wx tile
                + H * 4 * TH * act_bytes    # wh tile
                + 4 * TH * 4                # bias tile
                + TB * TH * 4               # cx tile
                + TB * TH * hy_bytes        # hy tile
                + TB * TH * 4)              # cy tile
    limit = int(fp * 1.5) + (2 << 20)       # headroom for Mosaic internal scratch
    try:
        cap = int(pltpu.get_tpu_info().vmem_capacity_bytes * 3 // 4)
    except Exception:
        cap = 48 * 1024 * 1024               # safe below v7x's 64 MiB physical
    return max(min(limit, cap), 32 * 1024 * 1024)


def lstm_cell(x, hx, cx, params, *, tile_b=256):
    """Single LSTM step. Returns (hy, cy): hy in x.dtype, cy in float32."""
    mxu_dtype = params["mxu_dtype"]
    I, H, H_pad, TH = params["I"], params["H"], params["H_pad"], params["TH"]
    G = H_pad // TH

    B = x.shape[0]
    B8 = _round_up(B, 8)
    n_b_tiles = _cdiv(B8, tile_b)
    TB = _round_up(_cdiv(B8, n_b_tiles), 8)   # B_pad ~= B8, not round_up(B8, tile_b)
    B_pad = n_b_tiles * TB

    # Per-call activation prep only (cheap relative to weights).
    xp = jnp.pad(x, ((0, B_pad - B), (0, 0))).astype(mxu_dtype)
    hxp = jnp.pad(hx, ((0, B_pad - B), (0, 0))).astype(mxu_dtype)
    cxp = jnp.pad(cx.astype(jnp.float32), ((0, B_pad - B), (0, H_pad - H)))

    act_bytes = jnp.dtype(mxu_dtype).itemsize
    hy_bytes = jnp.dtype(x.dtype).itemsize

    cost = pl.CostEstimate(
        flops=2 * B_pad * (I + H) * 4 * H_pad,
        transcendentals=5 * B_pad * H_pad,
        bytes_accessed=((I + H) * 4 * H_pad * act_bytes      # weights (once)
                        + B_pad * (I + H) * act_bytes        # activations
                        + 4 * H_pad * 4                      # bias
                        + B_pad * H_pad * (4 + 4 + hy_bytes)))  # cx, cy, hy

    out_shape = (jax.ShapeDtypeStruct((B_pad, H_pad), x.dtype),      # hy
                 jax.ShapeDtypeStruct((B_pad, H_pad), jnp.float32))  # cy (f32)

    hy, cy = pl.pallas_call(
        functools.partial(lstm_cell_kernel, TH=TH),
        out_shape=out_shape,
        # H-tile axis OUTER ("parallel": megacore shards disjoint weight halves),
        # batch-tile axis INNER: weight block index is constant across the inner
        # loop, so each weight tile is DMA'd from HBM exactly once.
        grid=(G, B_pad // TB),
        in_specs=[
            pl.BlockSpec((TB, I), lambda j, i: (i, 0)),          # x tile
            pl.BlockSpec((TB, H), lambda j, i: (i, 0)),          # hx tile
            pl.BlockSpec((I, 4 * TH), lambda j, i: (0, j)),      # wx tile (reused)
            pl.BlockSpec((H, 4 * TH), lambda j, i: (0, j)),      # wh tile (reused)
            pl.BlockSpec((1, 4 * TH), lambda j, i: (0, j)),      # bias tile
            pl.BlockSpec((TB, TH), lambda j, i: (i, j)),         # cx tile
        ],
        out_specs=(pl.BlockSpec((TB, TH), lambda j, i: (i, j)),  # hy
                   pl.BlockSpec((TB, TH), lambda j, i: (i, j))), # cy
        compiler_params=pltpu.CompilerParams(
            dimension_semantics=("parallel", "arbitrary"),
            vmem_limit_bytes=_vmem_limit_bytes(TB, TH, I, H, act_bytes, hy_bytes),
        ),
        cost_estimate=cost,
    )(xp, hxp, params["wx"], params["wh"], params["b"], cxp)

    return hy[:B, :H], cy[:B, :H]
    # TODO(synk): when stepping over a sequence, move the time loop inside one
    # pallas_call (weight-stationary in VMEM, hx/cx carried in VMEM scratch,
    # x_t streamed per step, cy aliased via input_output_aliases) and add a K
    # grid axis with an f32 accumulator for very large I+H on v7x (64 MiB VMEM).


def reference_lstm_cell(x, hx, cx, wx_t, wh_t, bx, bh, mxu_dtype=None):
    """Pure-JAX reference matching torch semantics; optional bf16 matmul path."""
    if mxu_dtype is None:
        gates = x @ wx_t + hx @ wh_t + bx + bh
    else:
        gates = (jnp.dot(x.astype(mxu_dtype), wx_t.astype(mxu_dtype),
                         preferred_element_type=jnp.float32)
                 + jnp.dot(hx.astype(mxu_dtype), wh_t.astype(mxu_dtype),
                           preferred_element_type=jnp.float32)
                 + bx + bh)
    H = hx.shape[-1]
    i = jax.nn.sigmoid(gates[:, 0 * H:1 * H])
    f = jax.nn.sigmoid(gates[:, 1 * H:2 * H])
    g = jnp.tanh(gates[:, 2 * H:3 * H])
    o = jax.nn.sigmoid(gates[:, 3 * H:4 * H])
    cy = cx * f + i * g
    hy = o * jnp.tanh(cy)
    return hy, cy


if __name__ == "__main__":
    batch = 2
    input_size = 16
    hidden_size = 32

    key = jax.random.PRNGKey(0)
    k_x, k_h, k_c, k_wx, k_wh, k_bx, k_bh = jax.random.split(key, 7)

    # Mimic reset_parameters(): uniform(-1/sqrt(H), 1/sqrt(H)).
    std = 1.0 / math.sqrt(hidden_size)
    wx_t = jax.random.uniform(k_wx, (input_size, 4 * hidden_size),
                              jnp.float32, -std, std)
    wh_t = jax.random.uniform(k_wh, (hidden_size, 4 * hidden_size),
                              jnp.float32, -std, std)
    bx = jax.random.uniform(k_bx, (1, 4 * hidden_size), jnp.float32, -std, std)
    bh = jax.random.uniform(k_bh, (1, 4 * hidden_size), jnp.float32, -std, std)

    x = jax.random.normal(k_x, (batch, input_size), jnp.float32)
    hx = jax.random.normal(k_h, (batch, hidden_size), jnp.float32)
    cx = jax.random.normal(k_c, (batch, hidden_size), jnp.float32)

    # One-time parameter prep (would be cached across timesteps).
    params = prepare_lstm_params(wx_t, wh_t, bx, bh)
    jax.block_until_ready(params)

    hy, cy = lstm_cell(x, hx, cx, params)
    jax.block_until_ready((hy, cy))

    # Tight check vs a bf16-matmul-consistent reference.
    hy_b, cy_b = reference_lstm_cell(x, hx, cx, wx_t, wh_t, bx, bh,
                                     mxu_dtype=jnp.bfloat16)
    assert jnp.allclose(hy, hy_b, atol=1e-3, rtol=1e-3)
    assert jnp.allclose(cy, cy_b, atol=1e-3, rtol=1e-3)

    # Loose check vs the full-f32 torch-semantics reference (bf16 rounding).
    hy_f, cy_f = reference_lstm_cell(x, hx, cx, wx_t, wh_t, bx, bh)
    assert jnp.allclose(hy, hy_f, atol=5e-2, rtol=0)
    assert jnp.allclose(cy, cy_f, atol=5e-2, rtol=0)

    print("KERNEL_OK")
</pallas_src>

<mosaic_0001>
module attributes {stable_mosaic.version = 11 : i64} {
  func.func @lstm_cell_kernel(%arg0: i32, %arg1: i32, %arg2: memref<8x16xbf16, #tpu.memory_space<vmem>>, %arg3: memref<8x32xbf16, #tpu.memory_space<vmem>>, %arg4: memref<16x512xbf16, #tpu.memory_space<vmem>>, %arg5: memref<32x512xbf16, #tpu.memory_space<vmem>>, %arg6: memref<1x512xf32, #tpu.memory_space<vmem>>, %arg7: memref<8x128xf32, #tpu.memory_space<vmem>>, %arg8: memref<8x128xf32, #tpu.memory_space<vmem>>, %arg9: memref<8x128xf32, #tpu.memory_space<vmem>>) attributes {dimension_semantics = [#tpu.dimension_semantics<parallel>, #tpu.dimension_semantics<arbitrary>], iteration_bounds = array<i64: 1, 1>, scalar_prefetch = 0 : i64, scratch_operands = 0 : i64, tpu.core_type = #tpu.core_type<tc>, window_params = [{transform_indices = @transform_0, window_bounds = array<i64: 8, 16>}, {transform_indices = @transform_1, window_bounds = array<i64: 8, 32>}, {transform_indices = @transform_2, window_bounds = array<i64: 16, 512>}, {transform_indices = @transform_3, window_bounds = array<i64: 32, 512>}, {transform_indices = @transform_4, window_bounds = array<i64: 1, 512>}, {transform_indices = @transform_5, window_bounds = array<i64: 8, 128>}, {transform_indices = @transform_6, window_bounds = array<i64: 8, 128>}, {transform_indices = @transform_7, window_bounds = array<i64: 8, 128>}]} {
    %c0 = arith.constant 0 : index
    %c0_0 = arith.constant 0 : index
    %0 = vector.load %arg2[%c0, %c0_0] : memref<8x16xbf16, #tpu.memory_space<vmem>>, vector<8x16xbf16>
    %c0_1 = arith.constant 0 : index
    %c0_2 = arith.constant 0 : index
    %1 = vector.load %arg4[%c0_1, %c0_2] : memref<16x512xbf16, #tpu.memory_space<vmem>>, vector<16x512xbf16>
    %cst = arith.constant dense<0.000000e+00> : vector<8x512xf32>
    %2 = tpu.matmul %0, %1, %cst {dimension_numbers = #tpu.dot_dimension_numbers<[1], [0], [0], [1], [0, 0, 1, 1], [], []>} : vector<8x16xbf16>, vector<16x512xbf16>, vector<8x512xf32> -> vector<8x512xf32>
    %c0_3 = arith.constant 0 : index
    %c0_4 = arith.constant 0 : index
    %3 = vector.load %arg3[%c0_3, %c0_4] : memref<8x32xbf16, #tpu.memory_space<vmem>>, vector<8x32xbf16>
    %c0_5 = arith.constant 0 : index
    %c0_6 = arith.constant 0 : index
    %4 = vector.load %arg5[%c0_5, %c0_6] : memref<32x512xbf16, #tpu.memory_space<vmem>>, vector<32x512xbf16>
    %cst_7 = arith.constant dense<0.000000e+00> : vector<8x512xf32>
    %5 = tpu.matmul %3, %4, %cst_7 {dimension_numbers = #tpu.dot_dimension_numbers<[1], [0], [0], [1], [0, 0, 1, 1], [], []>} : vector<8x32xbf16>, vector<32x512xbf16>, vector<8x512xf32> -> vector<8x512xf32>
    %6 = arith.addf %2, %5 : vector<8x512xf32>
    %c0_8 = arith.constant 0 : index
    %c0_9 = arith.constant 0 : index
    %7 = vector.load %arg6[%c0_8, %c0_9] : memref<1x512xf32, #tpu.memory_space<vmem>>, vector<1x512xf32>
    %8 = vector.broadcast %7 : vector<1x512xf32> to vector<8x512xf32>
    %9 = arith.addf %6, %8 : vector<8x512xf32>
    %10 = vector.extract_strided_slice %9 {offsets = [0, 0], sizes = [8, 128], strides = [1, 1]} : vector<8x512xf32> to vector<8x128xf32>
    %cst_10 = arith.constant 5.000000e-01 : f32
    %11 = vector.broadcast %cst_10 : f32 to vector<8x128xf32>
    %12 = arith.mulf %11, %10 : vector<8x128xf32>
    %13 = math.tanh %12 : vector<8x128xf32>
    %cst_11 = arith.constant 5.000000e-01 : f32
    %14 = vector.broadcast %cst_11 : f32 to vector<8x128xf32>
    %15 = arith.mulf %14, %13 : vector<8x128xf32>
    %cst_12 = arith.constant 5.000000e-01 : f32
    %16 = vector.broadcast %cst_12 : f32 to vector<8x128xf32>
    %17 = arith.addf %15, %16 : vector<8x128xf32>
    %18 = vector.extract_strided_slice %9 {offsets = [0, 128], sizes = [8, 128], strides = [1, 1]} : vector<8x512xf32> to vector<8x128xf32>
    %cst_13 = arith.constant 5.000000e-01 : f32
    %19 = vector.broadcast %cst_13 : f32 to vector<8x128xf32>
    %20 = arith.mulf %19, %18 : vector<8x128xf32>
    %21 = math.tanh %20 : vector<8x128xf32>
    %cst_14 = arith.constant 5.000000e-01 : f32
    %22 = vector.broadcast %cst_14 : f32 to vector<8x128xf32>
    %23 = arith.mulf %22, %21 : vector<8x128xf32>
    %cst_15 = arith.constant 5.000000e-01 : f32
    %24 = vector.broadcast %cst_15 : f32 to vector<8x128xf32>
    %25 = arith.addf %23, %24 : vector<8x128xf32>
    %26 = vector.extract_strided_slice %9 {offsets = [0, 256], sizes = [8, 128], strides = [1, 1]} : vector<8x512xf32> to vector<8x128xf32>
    %27 = math.tanh %26 : vector<8x128xf32>
    %28 = vector.extract_strided_slice %9 {offsets = [0, 384], sizes = [8, 128], strides = [1, 1]} : vector<8x512xf32> to vector<8x128xf32>
    %cst_16 = arith.constant 5.000000e-01 : f32
    %29 = vector.broadcast %cst_16 : f32 to vector<8x128xf32>
    %30 = arith.mulf %29, %28 : vector<8x128xf32>
    %31 = math.tanh %30 : vector<8x128xf32>
    %cst_17 = arith.constant 5.000000e-01 : f32
    %32 = vector.broadcast %cst_17 : f32 to vector<8x128xf32>
    %33 = arith.mulf %32, %31 : vector<8x128xf32>
    %cst_18 = arith.constant 5.000000e-01 : f32
    %34 = vector.broadcast %cst_18 : f32 to vector<8x128xf32>
    %35 = arith.addf %33, %34 : vector<8x128xf32>
    %c0_19 = arith.constant 0 : index
    %c0_20 = arith.constant 0 : index
    %36 = vector.load %arg7[%c0_19, %c0_20] : memref<8x128xf32, #tpu.memory_space<vmem>>, vector<8x128xf32>
    %37 = arith.mulf %36, %25 : vector<8x128xf32>
    %38 = arith.mulf %17, %27 : vector<8x128xf32>
    %39 = arith.addf %37, %38 : vector<8x128xf32>
    %40 = math.tanh %39 : vector<8x128xf32>
    %41 = arith.mulf %35, %40 : vector<8x128xf32>
    %c0_21 = arith.constant 0 : index
    %c0_22 = arith.constant 0 : index
    %42 = vector.load %arg9[%c0_21, %c0_22] : memref<8x128xf32, #tpu.memory_space<vmem>>, vector<8x128xf32>
    tpu.vector_store %arg9[%c0_21, %c0_22], %39 {strides = array<i32>} : memref<8x128xf32, #tpu.memory_space<vmem>>, vector<8x128xf32>,
    %c0_23 = arith.constant 0 : index
    %c0_24 = arith.constant 0 : index
    %43 = vector.load %arg8[%c0_23, %c0_24] : memref<8x128xf32, #tpu.memory_space<vmem>>, vector<8x128xf32>
    tpu.vector_store %arg8[%c0_23, %c0_24], %41 {strides = array<i32>} : memref<8x128xf32, #tpu.memory_space<vmem>>, vector<8x128xf32>,
    return
  }
  func.func @transform_0(%arg0: i32, %arg1: i32) -> (i32, i32) {
    %c0_i32 = arith.constant 0 : i32
    %c0_i32_0 = arith.constant 0 : i32
    return %arg1, %c0_i32 : i32, i32
  }
  func.func @transform_1(%arg0: i32, %arg1: i32) -> (i32, i32) {
    %c0_i32 = arith.constant 0 : i32
    %c0_i32_0 = arith.constant 0 : i32
    return %arg1, %c0_i32 : i32, i32
  }
  func.func @transform_2(%arg0: i32, %arg1: i32) -> (i32, i32) {
    %c0_i32 = arith.constant 0 : i32
    %c0_i32_0 = arith.constant 0 : i32
    return %c0_i32, %arg0 : i32, i32
  }
  func.func @transform_3(%arg0: i32, %arg1: i32) -> (i32, i32) {
    %c0_i32 = arith.constant 0 : i32
    %c0_i32_0 = arith.constant 0 : i32
    return %c0_i32, %arg0 : i32, i32
  }
  func.func @transform_4(%arg0: i32, %arg1: i32) -> (i32, i32) {
    %c0_i32 = arith.constant 0 : i32
    %c0_i32_0 = arith.constant 0 : i32
    return %c0_i32, %arg0 : i32, i32
  }
  func.func @transform_5(%arg0: i32, %arg1: i32) -> (i32, i32) {
    %c0_i32 = arith.constant 0 : i32
    return %arg1, %arg0 : i32, i32
  }
  func.func @transform_6(%arg0: i32, %arg1: i32) -> (i32, i32) {
    %c0_i32 = arith.constant 0 : i32
    return %arg1, %arg0 : i32, i32
  }
  func.func @transform_7(%arg0: i32, %arg1: i32) -> (i32, i32) {
    %c0_i32 = arith.constant 0 : i32
    return %arg1, %arg0 : i32, i32
  }
}

</mosaic_0001>

<llo_original>
// kernel: tpu_custom_call.1
$region0: #{tpu_custom_call.1}
  #allocation0 [shape = 'u32[]', space=smem, size = 0x4, offset = 0x4, fixed_abs, tag = 'smem constant byte address 0x4 - core index']
  #allocation1 [shape = 'u32[144,128]{1,0:T(1,128)}', space=vmem, size = 0x12000, scoped, tag = 'internal scratch']
  %s0 = inlined_call_operand.hbm [shape: bf16[8,16], index: 0, kind: input, shape index: {}]
  %s1 = inlined_call_operand.hbm [shape: bf16[8,32], index: 1, kind: input, shape index: {}]
  %s2 = inlined_call_operand.hbm [shape: bf16[16,512], index: 2, kind: input, shape index: {}]
  %s3 = inlined_call_operand.hbm [shape: bf16[32,512], index: 3, kind: input, shape index: {}]
  %s4 = inlined_call_operand.vmem [shape: f32[1,512], index: 4, kind: input, shape index: {}]
  %s5 = inlined_call_operand.vmem [shape: f32[8,128], index: 5, kind: input, shape index: {}]
  %s6 = inlined_call_operand.hbm [shape: f32[8,128], index: 6, kind: output, shape index: {0}]
  %s7 = inlined_call_operand.hbm [shape: f32[8,128], index: 7, kind: output, shape index: {1}]
  %8 = xla_tuple %s6, %s7
  %s9 = sld [smem:[#allocation0]]
  $region58: #{tpu_custom_call.1} parent=0
    _
  %s11 = ssub.s32 1, %s9
  %s12 = scalar_select 0, %s11, %s9
  $region1: #{tpu_custom_call.1} parent=0
    #allocation2 [shape = 'u8[2048]{0}', space=vmem, size = 0x800, scoped, tag = 'input window, operand 0, single buffered']
    #allocation3 [shape = 's32[1]{0}', space=sflag, size = 0x4, scoped, tag = 'scoped memory for tpu_custom_call.1']
    #allocation4 [shape = 's32[1]{0}', space=sflag, size = 0x4, scoped, tag = 'scoped memory for tpu_custom_call.1']
    #allocation5 [shape = 'u8[2048]{0}', space=vmem, size = 0x800, scoped, tag = 'input window, operand 1, single buffered']
    #allocation6 [shape = 's32[1]{0}', space=sflag, size = 0x4, scoped, tag = 'scoped memory for tpu_custom_call.1']
    #allocation7 [shape = 'u8[16384]{0}', space=vmem, size = 0x4000, scoped, tag = 'input window, operand 2, single buffered']
    #allocation8 [shape = 'u8[32768]{0}', space=vmem, size = 0x8000, scoped, tag = 'input window, operand 3, single buffered']
    #allocation9 [shape = 's32[1]{0}', space=sflag, size = 0x4, scoped, tag = 'scoped memory for tpu_custom_call.1']
    #allocation10 [shape = 'u8[4096]{0}', space=vmem, size = 0x1000, scoped, tag = 'output window, operand 0, single buffered']
    #allocation11 [shape = 'u8[4096]{0}', space=vmem, size = 0x1000, scoped, tag = 'output window, operand 1, single buffered']
    #allocation12 [shape = 's32[1]{0}', space=sflag, size = 0x4, scoped, tag = 'scoped memory for tpu_custom_call.1']
    %13 = vsyncpa [#allocation3], 0
    %14 = vsyncpa [#allocation6], 0
    %15 = vsyncpa [#allocation9], 0
    %16 = vsyncpa [#allocation4], 0
    %17 = vsyncpa [#allocation12], 0
    // Predicated region
    $region2: #{tpu_custom_call.1} parent=1 // pred_check
      _
    $region3: #{tpu_custom_call.1} parent=1 // pred_check_branch
      %19 = sbr.rel (0) target = $region5
    $region4: #{tpu_custom_call.1} parent=1 // pred_region
      %s21 = ssub.s32 64, 64
      %22 = vsyncadd [#allocation3], %s21
      %s24 = sshll.u32 [#allocation2], 4
      %s25 = int_to_ptr.vmem [resolvable:$true] %s24
      %27 = dma.hbm_to_vmem [thread:$0]  %s0, 64, %s25, [#allocation3]
    $region5: #{tpu_custom_call.1} parent=1 // pred_fallthru
      _
    // Predicated region
    $region6: #{tpu_custom_call.1} parent=1 // pred_check
      _
    $region7: #{tpu_custom_call.1} parent=1 // pred_check_branch
      %29 = sbr.rel (0) target = $region9
    $region8: #{tpu_custom_call.1} parent=1 // pred_region
      %s31 = ssub.s32 64, 64
      %32 = vsyncadd [#allocation6], %s31
      %s34 = sshll.u32 [#allocation5], 4
      %s35 = int_to_ptr.vmem [resolvable:$true] %s34
      %37 = dma.hbm_to_vmem [thread:$0]  %s1, 64, %s35, [#allocation6]
    $region9: #{tpu_custom_call.1} parent=1 // pred_fallthru
      _
    // Predicated region
    $region10: #{tpu_custom_call.1} parent=1 // pred_check
      _
    $region11: #{tpu_custom_call.1} parent=1 // pred_check_branch
      %39 = sbr.rel (0) target = $region13
    $region12: #{tpu_custom_call.1} parent=1 // pred_region
      %s41 = ssub.s32 512, 512
      %42 = vsyncadd [#allocation6], %s41
      %s43 = sshll.u32 [#allocation7], 4
      %s44 = int_to_ptr.vmem [resolvable:$true] %s43
      %49 = dma.hbm_to_vmem [thread:$0]  %s2, 512, %s44, [#allocation6], 256, 256, 16
    $region13: #{tpu_custom_call.1} parent=1 // pred_fallthru
      _
    // Predicated region
    $region14: #{tpu_custom_call.1} parent=1 // pred_check
      _
    $region15: #{tpu_custom_call.1} parent=1 // pred_check_branch
      %51 = sbr.rel (0) target = $region17
    $region16: #{tpu_custom_call.1} parent=1 // pred_region
      %s53 = ssub.s32 1024, 1024
      %54 = vsyncadd [#allocation9], %s53
      %s55 = sshll.u32 [#allocation8], 4
      %s56 = int_to_ptr.vmem [resolvable:$true] %s55
      %61 = dma.hbm_to_vmem [thread:$0]  %s3, 1024, %s56, [#allocation9], 256, 256, 16
    $region17: #{tpu_custom_call.1} parent=1 // pred_fallthru
      _
    // Predicated region
    $region18: #{tpu_custom_call.1} parent=1 // pred_check
      _
    $region19: #{tpu_custom_call.1} parent=1 // pred_check_branch
      %63 = sbr.rel (0) target = $region21
    $region20: #{tpu_custom_call.1} parent=1 // pred_region
      _
    $region21: #{tpu_custom_call.1} parent=1 // pred_fallthru
      _
    // Predicated region
    $region22: #{tpu_custom_call.1} parent=1 // pred_check
      _
    $region23: #{tpu_custom_call.1} parent=1 // pred_check_branch
      %65 = sbr.rel (0) target = $region25
    $region24: #{tpu_custom_call.1} parent=1 // pred_region
      _
    $region25: #{tpu_custom_call.1} parent=1 // pred_fallthru
      _
    // Predicated region
    $region26: #{tpu_custom_call.1} parent=1 // pred_check
      _
    $region27: #{tpu_custom_call.1} parent=1 // pred_check_branch
      %67 = sbr.rel (0) target = $region29
    $region28: #{tpu_custom_call.1} parent=1 // pred_region
      %68 = dma.done [#allocation3], 64
    $region29: #{tpu_custom_call.1} parent=1 // pred_fallthru
      _
    // Predicated region
    $region30: #{tpu_custom_call.1} parent=1 // pred_check
      _
    $region31: #{tpu_custom_call.1} parent=1 // pred_check_branch
      %70 = sbr.rel (0) target = $region33
    $region32: #{tpu_custom_call.1} parent=1 // pred_region
      %71 = dma.done [#allocation6], 64
    $region33: #{tpu_custom_call.1} parent=1 // pred_fallthru
      _
    // Predicated region
    $region34: #{tpu_custom_call.1} parent=1 // pred_check
      _
    $region35: #{tpu_custom_call.1} parent=1 // pred_check_branch
      %73 = sbr.rel (0) target = $region37
    $region36: #{tpu_custom_call.1} parent=1 // pred_region
      %74 = dma.done [#allocation6], 512
    $region37: #{tpu_custom_call.1} parent=1 // pred_fallthru
      _
    // Predicated region
    $region38: #{tpu_custom_call.1} parent=1 // pred_check
      _
    $region39: #{tpu_custom_call.1} parent=1 // pred_check_branch
      %76 = sbr.rel (0) target = $region41
    $region40: #{tpu_custom_call.1} parent=1 // pred_region
      %77 = dma.done [#allocation9], 1024
    $region41: #{tpu_custom_call.1} parent=1 // pred_fallthru
      _
    %v79 = vld [vmem:[#allocation2] sm:$0xf]
    %v80 = vld [vmem:[#allocation7] sm:$0xff]
    %v81 = vld [vmem:[#allocation7 + $0x8] sm:$0xff]
    %v82 = vld [vmem:[#allocation7 + $0x10] sm:$0xff]
    %v83 = vld [vmem:[#allocation7 + $0x18] sm:$0xff]
    %v84 = vld [vmem:[#allocation5] sm:$0xf]
    %v85 = vld [vmem:[#allocation8] sm:$0xff]
    %v86 = vld [vmem:[#allocation8 + $0x8] sm:$0xff]
    %v87 = vld [vmem:[#allocation8 + $0x10] sm:$0xff]
    %v88 = vld [vmem:[#allocation8 + $0x18] sm:$0xff]
    %v89 = vld [vmem:[#allocation8 + $0x20] sm:$0xff]
    %v90 = vld [vmem:[#allocation8 + $0x28] sm:$0xff]
    %v91 = vld [vmem:[#allocation8 + $0x30] sm:$0xff]
    %v92 = vld [vmem:[#allocation8 + $0x38] sm:$0xff]
    %v101 = vunpack.c.l.b16 %v85
    %v102 = vunpack.c.h.b16 %v85
    %v103 = vunpack.c.l.b16 %v86
    %v104 = vunpack.c.h.b16 %v86
    %v105 = vunpack.c.l.b16 %v87
    %v106 = vunpack.c.h.b16 %v87
    %v107 = vunpack.c.l.b16 %v88
    %v108 = vunpack.c.h.b16 %v88
    %v109 = vunpack.c.l.b16 %v89
    %v110 = vunpack.c.h.b16 %v89
    %v111 = vunpack.c.l.b16 %v90
    %v112 = vunpack.c.h.b16 %v90
    %v113 = vunpack.c.l.b16 %v91
    %v114 = vunpack.c.h.b16 %v91
    %v115 = vunpack.c.l.b16 %v92
    %v116 = vunpack.c.h.b16 %v92
    %v117 = vpack.c.b16 %v105, %v101
    %v118 = vpack.c.b16 %v106, %v102
    %v119 = vpack.c.b16 %v107, %v103
    %v120 = vpack.c.b16 %v108, %v104
    %v121 = vpack.c.b16 %v113, %v109
    %v122 = vpack.c.b16 %v114, %v110
    %v123 = vpack.c.b16 %v115, %v111
    %v124 = vpack.c.b16 %v116, %v112
    %vm133 = vcmask 261120
    %v135 = vsel %vm133, %v84, 0
    %137 = vmatprep.subr.bf16.mxu0 %v118
    %138 = vmatpush1.bf16.msra.mxu0 %v117
    %139 = vmatprep.subr.bf16.mxu0 %v122
    %140 = vmatpush1.bf16.msra.mxu0 %v121
    %141 = vmatprep.subr.bf16.mxu0 0
    %142 = vmatpush1.bf16.msra.mxu0 0
    %143 = vmatprep.subr.bf16.mxu0 0
    %144 = vmatpush1.bf16.msra.mxu0 0
    %145 = vmatprep.subr.bf16.mxu0 0
    %146 = vmatpush1.bf16.msra.mxu0 0
    %147 = vmatprep.subr.bf16.mxu0 0
    %148 = vmatpush1.bf16.msra.mxu0 0
    %149 = vmatprep.subr.bf16.mxu0 0
    %150 = vmatpush1.bf16.msra.mxu0 0
    %151 = vmatprep.subr.bf16.mxu0 0
    %152 = vmatpush1.bf16.msra.mxu0 0
    %153 = vmatprep.subr.bf16.mxu0 0
    %154 = vmatpush1.bf16.msra.mxu0 0
    %155 = vmatprep.subr.bf16.mxu0 0
    %156 = vmatpush1.bf16.msra.mxu0 0
    %157 = vmatprep.subr.bf16.mxu0 0
    %158 = vmatpush1.bf16.msra.mxu0 0
    %159 = vmatprep.subr.bf16.mxu0 0
    %160 = vmatpush1.bf16.msra.mxu0 0
    %161 = vmatprep.subr.bf16.mxu0 0
    %162 = vmatpush1.bf16.msra.mxu0 0
    %163 = vmatprep.subr.bf16.mxu0 0
    %164 = vmatpush1.bf16.msra.mxu0 0
    %165 = vmatprep.subr.bf16.mxu0 0
    %166 = vmatpush1.bf16.msra.mxu0 0
    %167 = vmatprep.subr.bf16.mxu0 0
    %168 = vmatpush1.bf16.msra.mxu0 0
    %169 = vmatprep.mubr.bf16.mxu0 0
    %170 = vmatmul.mubr.bf16.gmra.mrb[0].mxu0 %v135
    %v171 = vpop.f32.mrb[0].mxu0
    %v172 = vadd.f32 0.0, %v171
    %v173 = vpop.f32.mrb[0].mxu0
    %v174 = vadd.f32 0.0, %v173
    %v175 = vpop.f32.mrb[0].mxu0
    %v176 = vpop.f32.mrb[0].mxu0
    %177 = vdwg.mxu0
    %178 = vmatprep.subr.bf16.mxu0 %v120
    %179 = vmatpush1.bf16.msra.mxu0 %v119
    %180 = vmatprep.subr.bf16.mxu0 %v124
    %181 = vmatpush1.bf16.msra.mxu0 %v123
    %182 = vmatprep.subr.bf16.mxu0 0
    %183 = vmatpush1.bf16.msra.mxu0 0
    %184 = vmatprep.subr.bf16.mxu0 0
    %185 = vmatpush1.bf16.msra.mxu0 0
    %186 = vmatprep.subr.bf16.mxu0 0
    %187 = vmatpush1.bf16.msra.mxu0 0
    %188 = vmatprep.subr.bf16.mxu0 0
    %189 = vmatpush1.bf16.msra.mxu0 0
    %190 = vmatprep.subr.bf16.mxu0 0
    %191 = vmatpush1.bf16.msra.mxu0 0
    %192 = vmatprep.subr.bf16.mxu0 0
    %193 = vmatpush1.bf16.msra.mxu0 0
    %194 = vmatprep.subr.bf16.mxu0 0
    %195 = vmatpush1.bf16.msra.mxu0 0
    %196 = vmatprep.subr.bf16.mxu0 0
    %197 = vmatpush1.bf16.msra.mxu0 0
    %198 = vmatprep.subr.bf16.mxu0 0
    %199 = vmatpush1.bf16.msra.mxu0 0
    %200 = vmatprep.subr.bf16.mxu0 0
    %201 = vmatpush1.bf16.msra.mxu0 0
    %202 = vmatprep.subr.bf16.mxu0 0
    %203 = vmatpush1.bf16.msra.mxu0 0
    %204 = vmatprep.subr.bf16.mxu0 0
    %205 = vmatpush1.bf16.msra.mxu0 0
    %206 = vmatprep.subr.bf16.mxu0 0
    %207 = vmatpush1.bf16.msra.mxu0 0
    %208 = vmatprep.subr.bf16.mxu0 0
    %209 = vmatpush1.bf16.msra.mxu0 0
    %210 = vmatprep.mubr.bf16.mxu0 0
    %211 = vmatmul.mubr.bf16.gmra.mrb[0].mxu0 %v135
    %v212 = vpop.f32.mrb[0].mxu0
    %v213 = vadd.f32 0.0, %v212
    %v214 = vpop.f32.mrb[0].mxu0
    %v215 = vadd.f32 0.0, %v214
    %v216 = vpop.f32.mrb[0].mxu0
    %v217 = vpop.f32.mrb[0].mxu0
    %218 = vdwg.mxu0
    %v223 = vunpack.c.l.b16 %v80
    %v224 = vunpack.c.h.b16 %v80
    %v225 = vunpack.c.l.b16 %v81
    %v226 = vunpack.c.h.b16 %v81
    %v227 = vunpack.c.l.b16 %v82
    %v228 = vunpack.c.h.b16 %v82
    %v229 = vunpack.c.l.b16 %v83
    %v230 = vunpack.c.h.b16 %v83
    %v231 = vpack.c.b16 %v227, %v223
    %v232 = vpack.c.b16 %v228, %v224
    %v233 = vpack.c.b16 %v229, %v225
    %v234 = vpack.c.b16 %v230, %v226
    %vm239 = vcmask 130048
    %v241 = vsel %vm239, %v79, 0
    %243 = vmatprep.subr.bf16.mxu0 %v232
    %244 = vmatpush1.bf16.msra.mxu0 %v231
    %245 = vmatprep.subr.bf16.mxu0 0
    %246 = vmatpush1.bf16.msra.mxu0 0
    %247 = vmatprep.subr.bf16.mxu0 0
    %248 = vmatpush1.bf16.msra.mxu0 0
    %249 = vmatprep.subr.bf16.mxu0 0
    %250 = vmatpush1.bf16.msra.mxu0 0
    %251 = vmatprep.subr.bf16.mxu0 0
    %252 = vmatpush1.bf16.msra.mxu0 0
    %253 = vmatprep.subr.bf16.mxu0 0
    %254 = vmatpush1.bf16.msra.mxu0 0
    %255 = vmatprep.subr.bf16.mxu0 0
    %256 = vmatpush1.bf16.msra.mxu0 0
    %257 = vmatprep.subr.bf16.mxu0 0
    %258 = vmatpush1.bf16.msra.mxu0 0
    %259 = vmatprep.subr.bf16.mxu0 0
    %260 = vmatpush1.bf16.msra.mxu0 0
    %261 = vmatprep.subr.bf16.mxu0 0
    %262 = vmatpush1.bf16.msra.mxu0 0
    %263 = vmatprep.subr.bf16.mxu0 0
    %264 = vmatpush1.bf16.msra.mxu0 0
    %265 = vmatprep.subr.bf16.mxu0 0
    %266 = vmatpush1.bf16.msra.mxu0 0
    %267 = vmatprep.subr.bf16.mxu0 0
    %268 = vmatpush1.bf16.msra.mxu0 0
    %269 = vmatprep.subr.bf16.mxu0 0
    %270 = vmatpush1.bf16.msra.mxu0 0
    %271 = vmatprep.subr.bf16.mxu0 0
    %272 = vmatpush1.bf16.msra.mxu0 0
    %273 = vmatprep.subr.bf16.mxu0 0
    %274 = vmatpush1.bf16.msra.mxu0 0
    %275 = vmatprep.mubr.bf16.mxu0 0
    %276 = vmatmul.mubr.bf16.gmra.mrb[0].mxu0 %v241
    %v277 = vpop.f32.mrb[0].mxu0
    %v278 = vadd.f32 %v172, %v277
    %v279 = vpop.f32.mrb[0].mxu0
    %v280 = vadd.f32 %v174, %v279
    %v281 = vpop.f32.mrb[0].mxu0
    %v282 = vpop.f32.mrb[0].mxu0
    %283 = vdwg.mxu0
    %284 = vmatprep.subr.bf16.mxu0 %v234
    %285 = vmatpush1.bf16.msra.mxu0 %v233
    %286 = vmatprep.subr.bf16.mxu0 0
    %287 = vmatpush1.bf16.msra.mxu0 0
    %288 = vmatprep.subr.bf16.mxu0 0
    %289 = vmatpush1.bf16.msra.mxu0 0
    %290 = vmatprep.subr.bf16.mxu0 0
    %291 = vmatpush1.bf16.msra.mxu0 0
    %292 = vmatprep.subr.bf16.mxu0 0
    %293 = vmatpush1.bf16.msra.mxu0 0
    %294 = vmatprep.subr.bf16.mxu0 0
    %295 = vmatpush1.bf16.msra.mxu0 0
    %296 = vmatprep.subr.bf16.mxu0 0
    %297 = vmatpush1.bf16.msra.mxu0 0
    %298 = vmatprep.subr.bf16.mxu0 0
    %299 = vmatpush1.bf16.msra.mxu0 0
    %300 = vmatprep.subr.bf16.mxu0 0
    %301 = vmatpush1.bf16.msra.mxu0 0
    %302 = vmatprep.subr.bf16.mxu0 0
    %303 = vmatpush1.bf16.msra.mxu0 0
    %304 = vmatprep.subr.bf16.mxu0 0
    %305 = vmatpush1.bf16.msra.mxu0 0
    %306 = vmatprep.subr.bf16.mxu0 0
    %307 = vmatpush1.bf16.msra.mxu0 0
    %308 = vmatprep.subr.bf16.mxu0 0
    %309 = vmatpush1.bf16.msra.mxu0 0
    %310 = vmatprep.subr.bf16.mxu0 0
    %311 = vmatpush1.bf16.msra.mxu0 0
    %312 = vmatprep.subr.bf16.mxu0 0
    %313 = vmatpush1.bf16.msra.mxu0 0
    %314 = vmatprep.subr.bf16.mxu0 0
    %315 = vmatpush1.bf16.msra.mxu0 0
    %316 = vmatprep.mubr.bf16.mxu0 0
    %317 = vmatmul.mubr.bf16.gmra.mrb[0].mxu0 %v241
    %v318 = vpop.f32.mrb[0].mxu0
    %v319 = vadd.f32 %v213, %v318
    %v320 = vpop.f32.mrb[0].mxu0
    %v321 = vadd.f32 %v215, %v320
    %v322 = vpop.f32.mrb[0].mxu0
    %v323 = vpop.f32.mrb[0].mxu0
    %324 = vdwg.mxu0
    %v325 = vld [vmem:[%s4] sm:$0xf]
    %v327 = vlaneseq
    %v328 = vshrl.u32 %v327, 7
    %v329 = vsub.s32 0, %v328
    %v330 = vrot.slane %v325, %v329
    %v331 = vlaneseq
    %v332 = vshrl.u32 %v331, 7
    %v333 = vsub.s32 1, %v332
    %v334 = vrot.slane %v325, %v333
    %v335 = vlaneseq
    %v336 = vshrl.u32 %v335, 7
    %v337 = vsub.s32 2, %v336
    %v338 = vrot.slane %v325, %v337
    %v339 = vlaneseq
    %v340 = vshrl.u32 %v339, 7
    %v341 = vsub.s32 3, %v340
    %v342 = vrot.slane %v325, %v341
    %v347 = vadd.f32 %v278, %v330
    %v348 = vadd.f32 %v280, %v334
    %v349 = vadd.f32 %v319, %v338
    %v350 = vadd.f32 %v321, %v342
    %v351 = vmul.f32 %v347, 0.5
    %v352 = vtanh.pop %v351
    %v353 = vmul.f32 %v352, 0.5
    %v354 = vadd.f32 %v353, 0.5
    %v355 = vmul.f32 %v348, 0.5
    %v356 = vtanh.pop %v355
    %v357 = vmul.f32 %v356, 0.5
    %v358 = vadd.f32 %v357, 0.5
    %v359 = vtanh.pop %v349
    %v360 = vmul.f32 %v350, 0.5
    %v361 = vtanh.pop %v360
    %v362 = vmul.f32 %v361, 0.5
    %v363 = vadd.f32 %v362, 0.5
    %v364 = vld [vmem:[%s5] sm:$0xff]
    %v365 = vmul.f32 %v364, %v358
    %v366 = vmul.f32 %v354, %v359
    %v367 = vadd.f32 %v365, %v366
    %v368 = vtanh.pop %v367
    %v369 = vmul.f32 %v363, %v368
    %370 = vst [vmem:[#allocation11] sm:$0xff] %v367
    %371 = vst [vmem:[#allocation10] sm:$0xff] %v369
    // Predicated region
    $region42: #{tpu_custom_call.1} parent=1 // pred_check
      _
    $region43: #{tpu_custom_call.1} parent=1 // pred_check_branch
      %373 = sbr.rel (0) target = $region45
    $region44: #{tpu_custom_call.1} parent=1 // pred_region
      %s375 = ssub.s32 128, 128
      %376 = vsyncadd [#allocation4], %s375
      %s378 = sshll.u32 [#allocation10], 4
      %s379 = int_to_ptr.vmem [resolvable:$true] %s378
      %381 = dma.vmem_to_hbm [thread:$0]  %s379, 128, %s6, [#allocation4]
    $region45: #{tpu_custom_call.1} parent=1 // pred_fallthru
      _
    // Predicated region
    $region46: #{tpu_custom_call.1} parent=1 // pred_check
      _
    $region47: #{tpu_custom_call.1} parent=1 // pred_check_branch
      %383 = sbr.rel (0) target = $region49
    $region48: #{tpu_custom_call.1} parent=1 // pred_region
      %s385 = ssub.s32 128, 128
      %386 = vsyncadd [#allocation12], %s385
      %s388 = sshll.u32 [#allocation11], 4
      %s389 = int_to_ptr.vmem [resolvable:$true] %s388
      %391 = dma.vmem_to_hbm [thread:$0]  %s389, 128, %s7, [#allocation12]
    $region49: #{tpu_custom_call.1} parent=1 // pred_fallthru
      _
    // Predicated region
    $region50: #{tpu_custom_call.1} parent=1 // pred_check
      _
    $region51: #{tpu_custom_call.1} parent=1 // pred_check_branch
      %393 = sbr.rel (0) target = $region53
    $region52: #{tpu_custom_call.1} parent=1 // pred_region
      %394 = dma.done [#allocation4], 128
    $region53: #{tpu_custom_call.1} parent=1 // pred_fallthru
      _
    // Predicated region
    $region54: #{tpu_custom_call.1} parent=1 // pred_check
      _
    $region55: #{tpu_custom_call.1} parent=1 // pred_check_branch
      %396 = sbr.rel (0) target = $region57
    $region56: #{tpu_custom_call.1} parent=1 // pred_region
      %397 = dma.done [#allocation12], 128
    $region57: #{tpu_custom_call.1} parent=1 // pred_fallthru
      _
    %398 = vsyncpa [#allocation3], 1
    %399 = vsyncpa [#allocation6], 1
    %400 = vsyncpa [#allocation9], 1
    %401 = vsyncpa [#allocation4], 1
    %402 = vsyncpa [#allocation12], 1

</llo_original>
